<compile_context>
chip_gen: v5e
topology: v5e:2x2
jax: 0.10.0
libtpu: 0.0.40
codegen_flags: <defaults>
</compile_context>

<pallas_src>
import jax
import jax.numpy as jnp
import numpy as np
from jax.experimental import pallas as pl
from jax.experimental.pallas import tpu as pltpu


def _transition_kernel(x_ref, scale_ref, shift_ref, w_ref, o_ref):
    # x_ref:     (4, TILE_P, Cin)  bf16; axis 0 = the four 2x2-window offsets
    # scale_ref: (1, Cin) f32      gamma / sqrt(var + eps)
    # shift_ref: (1, Cin) f32      beta - mean * scale
    # w_ref:     (Cin, Cout) bf16  1x1 conv weight (transposed), 0.25 folded in
    # o_ref:     (TILE_P, Cout)    pooled output tile
    scale = scale_ref[...]                           # (1, Cin) f32
    shift = shift_ref[...]                           # (1, Cin) f32

    # BatchNorm (folded, inference) + ReLU per window offset, accumulated into
    # the pool sum.  bf16 x promotes to f32 on the VPU; only one (TILE_P, Cin)
    # f32 temp stays live (vreg-pressure friendly at large tiles).
    pooled = jnp.maximum(x_ref[0] * scale + shift, 0.0)
    pooled = pooled + jnp.maximum(x_ref[1] * scale + shift, 0.0)
    pooled = pooled + jnp.maximum(x_ref[2] * scale + shift, 0.0)
    pooled = pooled + jnp.maximum(x_ref[3] * scale + shift, 0.0)

    # 1x1 conv == channel matmul (0.25 pool factor pre-folded into w), bf16
    # operands, f32 accumulation on the MXU.
    z = jnp.dot(pooled.astype(jnp.bfloat16), w_ref[...],
                preferred_element_type=jnp.float32)  # (TILE_P, Cout)

    o_ref[...] = z.astype(o_ref.dtype)


def _pick_tile(total, target):
    """Largest multiple-of-8 divisor of `total` not exceeding `target`.

    `total` is always a multiple of 8 here, so 8 is a valid fallback.
    """
    best = 8
    t = 8
    limit = min(total, max(target, 8))
    while t <= limit:
        if total % t == 0:
            best = t
        t += 8
    return best


def transition_block_forward(x_nchw, gamma, beta, run_mean, run_var, conv_w,
                             eps=1e-5, tile_rows=None):
    """x_nchw: (N, Cin, H, W); conv_w: (Cout, Cin) or (Cout, Cin, 1, 1)."""
    N, Cin, H, W = x_nchw.shape
    Cout = conv_w.shape[0]
    assert H % 2 == 0 and W % 2 == 0
    Hp, Wp = H // 2, W // 2
    P = Hp * Wp                                      # pooled spatial size
    P_pad = ((P + 7) // 8) * 8                       # keep blocks sublane-aligned

    # --- glue: BN fold + layout (plain JAX, fused by XLA) ---
    scale = (gamma / jnp.sqrt(run_var + eps)).astype(jnp.float32)   # (Cin,)
    shift = (beta - run_mean * scale).astype(jnp.float32)           # (Cin,)

    # bf16 cast fused into the relayout: the transpose writes (and the kernel
    # reads) half the HBM bytes of the f32 version.
    # NCHW -> (N, 4, Hp*Wp, Cin); axis 1 is the 2x2 window offset k = 2*dr+dc.
    xb = x_nchw.astype(jnp.bfloat16)
    x6 = xb.reshape(N, Cin, Hp, 2, Wp, 2)
    x4 = jnp.transpose(x6, (0, 3, 5, 2, 4, 1)).reshape(N, 4, P, Cin)
    if P_pad != P:
        # pad rows compute garbage but are sliced off after the call (each
        # pooled pixel is independent, so this is exact).
        x4 = jnp.pad(x4, ((0, 0), (0, 0), (0, P_pad - P), (0, 0)))

    # 0.25 pool factor folded into the (transposed) 1x1 conv weight.
    w_k = (conv_w.reshape(Cout, Cin).T * jnp.float32(0.25)).astype(jnp.bfloat16)

    # --- tile selection ---
    if tile_rows is None:
        # Cap rows by a per-buffer VMEM budget (~8 MiB for the x block, bf16),
        # then aim for >= 512 rows per step to amortize per-step overhead.
        row_bytes = 4 * Cin * 2 + Cout * 4
        cap = max(8, ((8 << 20) // row_bytes) // 8 * 8)
        tile_rows = _pick_tile(P_pad, min(512, cap))
        # v7x megacore: make sure there are >= 2 grid points to shard.
        if N * (P_pad // tile_rows) < 2 and P_pad >= 16:
            tile_rows = _pick_tile(P_pad, P_pad // 2)
    assert P_pad % tile_rows == 0 and tile_rows % 8 == 0

    # --- explicit VMEM budget (v5e default scoped ~16 MiB; v7x physical 64) ---
    x_blk = 4 * tile_rows * Cin * 2
    o_blk = tile_rows * Cout * 4
    w_blk = Cin * Cout * 2
    p_blk = 2 * 8 * max(Cin, 128) * 4                # scale/shift, padded
    need = 2 * (x_blk + o_blk + w_blk + p_blk) + (2 << 20)
    vmem_limit = int(min(64 << 20, max(need, 16 << 20)))

    cost = pl.CostEstimate(
        flops=2 * N * P_pad * Cin * Cout + 8 * N * P_pad * Cin,
        transcendentals=0,
        bytes_accessed=int(x4.size) * 2 + int(w_k.size) * 2
                       + (int(scale.size) + int(shift.size)) * 4
                       + N * P_pad * Cout * 4,
    )

    out_flat = pl.pallas_call(
        _transition_kernel,
        out_shape=jax.ShapeDtypeStruct((N, P_pad, Cout), jnp.float32),
        grid_spec=pltpu.PrefetchScalarGridSpec(
            num_scalar_prefetch=0,
            grid=(N, P_pad // tile_rows),
            in_specs=[
                pl.BlockSpec((None, 4, tile_rows, Cin), lambda n, t: (n, 0, t, 0)),
                pl.BlockSpec((1, Cin), lambda n, t: (0, 0)),
                pl.BlockSpec((1, Cin), lambda n, t: (0, 0)),
                pl.BlockSpec((Cin, Cout), lambda n, t: (0, 0)),
            ],
            out_specs=pl.BlockSpec((None, tile_rows, Cout),
                                   lambda n, t: (n, t, 0)),
        ),
        compiler_params=pltpu.CompilerParams(
            dimension_semantics=("parallel", "parallel"),
            vmem_limit_bytes=vmem_limit),
        cost_estimate=cost,
    )(x4, scale.reshape(1, Cin), shift.reshape(1, Cin), w_k)

    # glue: drop pad rows, back to NCHW
    out = out_flat[:, :P, :].reshape(N, Hp, Wp, Cout).transpose(0, 3, 1, 2)
    return out


def _reference(x_nchw, gamma, beta, run_mean, run_var, conv_w, eps=1e-5):
    """Plain-JAX reference matching the PyTorch module in eval mode (f32)."""
    xn = (x_nchw - run_mean[None, :, None, None]) / jnp.sqrt(
        run_var[None, :, None, None] + eps)
    y = jnp.maximum(gamma[None, :, None, None] * xn + beta[None, :, None, None], 0.0)
    z = jnp.einsum('nchw,oc->nohw', y, conv_w)       # 1x1 conv, no bias
    N, Co, H, W = z.shape
    return z.reshape(N, Co, H // 2, 2, W // 2, 2).mean(axis=(3, 5))


if __name__ == "__main__":
    N, Cin, H, W = 2, 4, 16, 16
    Cout = 8

    key = jax.random.PRNGKey(0)
    kx, kw = jax.random.split(key)

    x = jax.random.normal(kx, (N, Cin, H, W), dtype=jnp.float32)

    # Deterministic synthetic parameters (shapes from __init__):
    #   bn1: gamma/beta/running_mean/running_var of shape (Cin,)
    #   conv1: weight of shape (Cout, Cin, 1, 1), no bias
    gamma = 1.0 + 0.1 * jnp.arange(Cin, dtype=jnp.float32)
    beta = 0.01 * jnp.arange(Cin, dtype=jnp.float32)
    run_mean = 0.05 * jnp.arange(Cin, dtype=jnp.float32) - 0.1
    run_var = 1.0 + 0.05 * jnp.arange(Cin, dtype=jnp.float32)
    conv_w = (jax.random.normal(kw, (Cout, Cin), dtype=jnp.float32)
              / jnp.sqrt(jnp.float32(Cin)))  # (Cout, Cin) == (Cout, Cin, 1, 1) squeezed

    # tile_rows=32 -> grid (N=2, tiles=2): exercises both grid axes.
    out = transition_block_forward(x, gamma, beta, run_mean, run_var, conv_w,
                                   tile_rows=32)
    out = jax.block_until_ready(out)

    ref = _reference(x, gamma, beta, run_mean, run_var, conv_w)
    assert out.shape == (N, Cout, H // 2, W // 2), out.shape

    # Also exercise the default (auto) tile selection path once.
    out2 = jax.block_until_ready(
        transition_block_forward(x, gamma, beta, run_mean, run_var, conv_w))

    # bf16 activation stream + bf16 MXU operands vs f32 reference.
    np.testing.assert_allclose(np.asarray(out), np.asarray(ref),
                               rtol=3e-2, atol=3e-2)
    np.testing.assert_allclose(np.asarray(out2), np.asarray(ref),
                               rtol=3e-2, atol=3e-2)
    print("KERNEL_OK")
</pallas_src>

<mosaic_0001>
module attributes {stable_mosaic.version = 11 : i64} {
  func.func @_transition_kernel(%arg0: i32, %arg1: i32, %arg2: memref<1x4x32x4xbf16, #tpu.memory_space<vmem>>, %arg3: memref<1x4xf32, #tpu.memory_space<vmem>>, %arg4: memref<1x4xf32, #tpu.memory_space<vmem>>, %arg5: memref<4x8xbf16, #tpu.memory_space<vmem>>, %arg6: memref<1x32x8xf32, #tpu.memory_space<vmem>>) attributes {dimension_semantics = [#tpu.dimension_semantics<parallel>, #tpu.dimension_semantics<parallel>], iteration_bounds = array<i64: 2, 2>, scalar_prefetch = 0 : i64, scratch_operands = 0 : i64, tpu.core_type = #tpu.core_type<tc>, window_params = [{transform_indices = @transform_0, window_bounds = array<i64: 1, 4, 32, 4>}, {pipeline_mode = #tpu.pipeline_mode<synchronous>, transform_indices = @transform_1, window_bounds = array<i64: 1, 4>}, {pipeline_mode = #tpu.pipeline_mode<synchronous>, transform_indices = @transform_2, window_bounds = array<i64: 1, 4>}, {pipeline_mode = #tpu.pipeline_mode<synchronous>, transform_indices = @transform_3, window_bounds = array<i64: 4, 8>}, {transform_indices = @transform_4, window_bounds = array<i64: 1, 32, 8>}]} {
    %c0 = arith.constant 0 : index
    %c0_0 = arith.constant 0 : index
    %0 = vector.load %arg3[%c0, %c0_0] : memref<1x4xf32, #tpu.memory_space<vmem>>, vector<1x4xf32>
    %c0_1 = arith.constant 0 : index
    %c0_2 = arith.constant 0 : index
    %1 = vector.load %arg4[%c0_1, %c0_2] : memref<1x4xf32, #tpu.memory_space<vmem>>, vector<1x4xf32>
    %c0_3 = arith.constant 0 : index
    %c0_4 = arith.constant 0 : index
    %c0_5 = arith.constant 0 : index
    %c0_6 = arith.constant 0 : index
    %2 = vector.load %arg2[%c0_3, %c0_4, %c0_5, %c0_6] : memref<1x4x32x4xbf16, #tpu.memory_space<vmem>>, vector<1x1x32x4xbf16>
    %3 = vector.shape_cast %2 : vector<1x1x32x4xbf16> to vector<32x4xbf16>
    %4 = arith.extf %3 : vector<32x4xbf16> to vector<32x4xf32>
    %5 = vector.broadcast %0 : vector<1x4xf32> to vector<32x4xf32>
    %6 = arith.mulf %4, %5 : vector<32x4xf32>
    %7 = vector.broadcast %1 : vector<1x4xf32> to vector<32x4xf32>
    %8 = arith.addf %6, %7 : vector<32x4xf32>
    %cst = arith.constant 0.000000e+00 : f32
    %9 = vector.broadcast %cst : f32 to vector<32x4xf32>
    %10 = arith.maximumf %8, %9 : vector<32x4xf32>
    %c0_7 = arith.constant 0 : index
    %c1 = arith.constant 1 : index
    %c0_8 = arith.constant 0 : index
    %c0_9 = arith.constant 0 : index
    %11 = vector.load %arg2[%c0_7, %c1, %c0_8, %c0_9] : memref<1x4x32x4xbf16, #tpu.memory_space<vmem>>, vector<1x1x32x4xbf16>
    %12 = vector.shape_cast %11 : vector<1x1x32x4xbf16> to vector<32x4xbf16>
    %13 = arith.extf %12 : vector<32x4xbf16> to vector<32x4xf32>
    %14 = vector.broadcast %0 : vector<1x4xf32> to vector<32x4xf32>
    %15 = arith.mulf %13, %14 : vector<32x4xf32>
    %16 = vector.broadcast %1 : vector<1x4xf32> to vector<32x4xf32>
    %17 = arith.addf %15, %16 : vector<32x4xf32>
    %cst_10 = arith.constant 0.000000e+00 : f32
    %18 = vector.broadcast %cst_10 : f32 to vector<32x4xf32>
    %19 = arith.maximumf %17, %18 : vector<32x4xf32>
    %20 = arith.addf %10, %19 : vector<32x4xf32>
    %c0_11 = arith.constant 0 : index
    %c2 = arith.constant 2 : index
    %c0_12 = arith.constant 0 : index
    %c0_13 = arith.constant 0 : index
    %21 = vector.load %arg2[%c0_11, %c2, %c0_12, %c0_13] : memref<1x4x32x4xbf16, #tpu.memory_space<vmem>>, vector<1x1x32x4xbf16>
    %22 = vector.shape_cast %21 : vector<1x1x32x4xbf16> to vector<32x4xbf16>
    %23 = arith.extf %22 : vector<32x4xbf16> to vector<32x4xf32>
    %24 = vector.broadcast %0 : vector<1x4xf32> to vector<32x4xf32>
    %25 = arith.mulf %23, %24 : vector<32x4xf32>
    %26 = vector.broadcast %1 : vector<1x4xf32> to vector<32x4xf32>
    %27 = arith.addf %25, %26 : vector<32x4xf32>
    %cst_14 = arith.constant 0.000000e+00 : f32
    %28 = vector.broadcast %cst_14 : f32 to vector<32x4xf32>
    %29 = arith.maximumf %27, %28 : vector<32x4xf32>
    %30 = arith.addf %20, %29 : vector<32x4xf32>
    %c0_15 = arith.constant 0 : index
    %c3 = arith.constant 3 : index
    %c0_16 = arith.constant 0 : index
    %c0_17 = arith.constant 0 : index
    %31 = vector.load %arg2[%c0_15, %c3, %c0_16, %c0_17] : memref<1x4x32x4xbf16, #tpu.memory_space<vmem>>, vector<1x1x32x4xbf16>
    %32 = vector.shape_cast %31 : vector<1x1x32x4xbf16> to vector<32x4xbf16>
    %33 = arith.extf %32 : vector<32x4xbf16> to vector<32x4xf32>
    %34 = vector.broadcast %0 : vector<1x4xf32> to vector<32x4xf32>
    %35 = arith.mulf %33, %34 : vector<32x4xf32>
    %36 = vector.broadcast %1 : vector<1x4xf32> to vector<32x4xf32>
    %37 = arith.addf %35, %36 : vector<32x4xf32>
    %cst_18 = arith.constant 0.000000e+00 : f32
    %38 = vector.broadcast %cst_18 : f32 to vector<32x4xf32>
    %39 = arith.maximumf %37, %38 : vector<32x4xf32>
    %40 = arith.addf %30, %39 : vector<32x4xf32>
    %41 = arith.truncf %40 : vector<32x4xf32> to vector<32x4xbf16>
    %c0_19 = arith.constant 0 : index
    %c0_20 = arith.constant 0 : index
    %42 = vector.load %arg5[%c0_19, %c0_20] : memref<4x8xbf16, #tpu.memory_space<vmem>>, vector<4x8xbf16>
    %cst_21 = arith.constant dense<0.000000e+00> : vector<32x8xf32>
    %43 = tpu.matmul %41, %42, %cst_21 {dimension_numbers = #tpu.dot_dimension_numbers<[1], [0], [0], [1], [0, 0, 1, 1], [], []>} : vector<32x4xbf16>, vector<4x8xbf16>, vector<32x8xf32> -> vector<32x8xf32>
    %c0_22 = arith.constant 0 : index
    %c0_23 = arith.constant 0 : index
    %c0_24 = arith.constant 0 : index
    %44 = vector.load %arg6[%c0_22, %c0_23, %c0_24] : memref<1x32x8xf32, #tpu.memory_space<vmem>>, vector<1x32x8xf32>
    %45 = vector.shape_cast %44 : vector<1x32x8xf32> to vector<32x8xf32>
    %46 = vector.shape_cast %43 : vector<32x8xf32> to vector<1x32x8xf32>
    tpu.vector_store %arg6[%c0_22, %c0_23, %c0_24], %46 {strides = array<i32>} : memref<1x32x8xf32, #tpu.memory_space<vmem>>, vector<1x32x8xf32>,
    return
  }
  func.func @transform_0(%arg0: i32, %arg1: i32) -> (i32, i32, i32, i32) {
    %c0_i32 = arith.constant 0 : i32
    %c0_i32_0 = arith.constant 0 : i32
    %c0_i32_1 = arith.constant 0 : i32
    return %arg0, %c0_i32, %arg1, %c0_i32_0 : i32, i32, i32, i32
  }
  func.func @transform_1(%arg0: i32, %arg1: i32) -> (i32, i32) {
    %c0_i32 = arith.constant 0 : i32
    %c0_i32_0 = arith.constant 0 : i32
    %c0_i32_1 = arith.constant 0 : i32
    return %c0_i32, %c0_i32_0 : i32, i32
  }
  func.func @transform_2(%arg0: i32, %arg1: i32) -> (i32, i32) {
    %c0_i32 = arith.constant 0 : i32
    %c0_i32_0 = arith.constant 0 : i32
    %c0_i32_1 = arith.constant 0 : i32
    return %c0_i32, %c0_i32_0 : i32, i32
  }
  func.func @transform_3(%arg0: i32, %arg1: i32) -> (i32, i32) {
    %c0_i32 = arith.constant 0 : i32
    %c0_i32_0 = arith.constant 0 : i32
    %c0_i32_1 = arith.constant 0 : i32
    return %c0_i32, %c0_i32_0 : i32, i32
  }
  func.func @transform_4(%arg0: i32, %arg1: i32) -> (i32, i32, i32) {
    %c0_i32 = arith.constant 0 : i32
    %c0_i32_0 = arith.constant 0 : i32
    return %arg0, %arg1, %c0_i32 : i32, i32, i32
  }
}

</mosaic_0001>

<llo_original>
// kernel: tpu_custom_call.1
$region0: #{tpu_custom_call.1}
  #allocation0 [shape = 'u32[]', space=smem, size = 0x4, offset = 0x4, fixed_abs, tag = 'smem constant byte address 0x4 - core index']
  #allocation1 [shape = 'u32[72,128]{1,0:T(1,128)}', space=vmem, size = 0x9000, scoped, tag = 'internal scratch']
  %s0 = inlined_call_operand.vmem [shape: bf16[2,4,64,4], index: 0, kind: input, shape index: {}]
  %s1 = inlined_call_operand.vmem [shape: f32[1,4], index: 1, kind: input, shape index: {}]
  %s2 = inlined_call_operand.vmem [shape: f32[1,4], index: 2, kind: input, shape index: {}]
  %s3 = inlined_call_operand.vmem [shape: bf16[4,8], index: 3, kind: input, shape index: {}]
  %s4 = inlined_call_operand.vmem [shape: f32[2,64,8], index: 4, kind: output, shape index: {}]
  %s5 = sld [smem:[#allocation0]]
  $region90: #{tpu_custom_call.1} parent=0
    _
  %s7 = ssub.s32 1, %s5
  %s8 = scalar_select 0, %s7, %s5
  $region1: #{tpu_custom_call.1} parent=0
    #allocation2 [shape = 'u8[65536]{0}', space=vmem, size = 0x10000, scoped, tag = 'input window, operand 0']
    loop: start=0, step=1, limit=6
    $region2: #{tpu_custom_call.1} parent=1 // loop_pre_header
      _
    $region3: #{tpu_custom_call.1} parent=1 // loop_header
      %s10 = sphi 0, %s14
      %p11 = scmp.ge.s32.totalorder %s10, 6
      %s17 = sphi 0, %s29
      %s18 = sphi 0, %s25
      %s19 = sphi 0, %s17
      %s20 = sphi 0, %s18
      %s21 = sphi 0, %s19
      %s22 = sphi 0, %s20
      %s34 = sphi 0, %s36
      %s37 = sphi 0, %s34
      %s38 = sphi 0, %s37
      %s54 = sphi 0, %s38
      %s58 = sphi 0, %s58
      %s60 = sphi 0, %s58
      %s61 = sphi 0, %s60
      %s75 = sphi 0, %s61
      %s79 = sphi 0, %s79
      %s81 = sphi 0, %s79
      %s82 = sphi 0, %s81
      %s96 = sphi 0, %s82
      %s100 = sphi 0, %s100
      %s102 = sphi 0, %s100
      %s103 = sphi 0, %s102
      %s117 = sphi 0, %s103
      %s125 = sphi 0, %s127
      %s128 = sphi 0, %s125
      %s129 = sphi 0, %s128
      %s145 = sphi 0, %s129
    $region4: #{tpu_custom_call.1} parent=1 // loop_header_branch
      %13 = sbr.rel (%p11) target = $region8
    $region5: #{tpu_custom_call.1} parent=1 // loop_body
      %s15 = ssub.s32 %s10, 1
      %s16 = ssub.s32 %s10, 2
      %s23 = sadd.s32 1, %s18
      %p24 = scmp.ge.s32.totalorder %s23, 2
      %s25 = scalar_select %p24, 0, %s23
      %s26 = sadd.s32 1, %s17
      %s27 = scalar_select %p24, %s26, %s17
      %p28 = scmp.ge.s32.totalorder %s27, 2
      %s29 = scalar_select %p28, 0, %s27
      %s30 = ssub.s32 %s17, %s29
      %s31 = ssub.s32 %s18, %s25
      %s32 = sor.u32 %s30, %s31
      %p33 = scmp.eq.s32.totalorder %s32, 0
      %s35 = sadd.s32 %s34, 1
      %s36 = scalar_select %p33, %s34, %s35
      %p39 = pneg %p33
      %p40 = scmp.eq.s32.totalorder %s10, 3
      %p41 = por %p39, %p40
      %p42 = scmp.ne.s32.totalorder %s34, %s37
      %p43 = scmp.eq.s32.totalorder %s10, 0
      %p44 = por %p42, %p43
      %p45 = scmp.ne.s32.totalorder %s34, %s37
      %p46 = scmp.eq.s32.totalorder %s15, 3
      %p47 = por %p45, %p46
      %p48 = scmp.ne.s32.totalorder %s37, %s38
      %p49 = scmp.eq.s32.totalorder %s15, 0
      %p50 = por %p48, %p49
      %p51 = scmp.ne.s32.totalorder %s37, %s38
      %p52 = scmp.eq.s32.totalorder %s16, 3
      %p53 = por %p51, %p52
      %p55 = scmp.ne.s32.totalorder %s38, %s54
      %p56 = scmp.eq.s32.totalorder %s16, 0
      %p57 = por %p55, %p56
      %s59 = sadd.s32 %s58, 1
      %p62 = scmp.eq.s32.totalorder %s10, 3
      %p63 = scmp.ne.s32.totalorder %s58, %s60
      %p64 = scmp.eq.s32.totalorder %s10, 0
      %p65 = por %p63, %p64
      %p66 = scmp.ne.s32.totalorder %s58, %s60
      %p67 = scmp.eq.s32.totalorder %s15, 3
      %p68 = por %p66, %p67
      %p69 = scmp.ne.s32.totalorder %s60, %s61
      %p70 = scmp.eq.s32.totalorder %s15, 0
      %p71 = por %p69, %p70
      %p72 = scmp.ne.s32.totalorder %s60, %s61
      %p73 = scmp.eq.s32.totalorder %s16, 3
      %p74 = por %p72, %p73
      %p76 = scmp.ne.s32.totalorder %s61, %s75
      %p77 = scmp.eq.s32.totalorder %s16, 0
      %p78 = por %p76, %p77
      %s80 = sadd.s32 %s79, 1
      %p83 = scmp.eq.s32.totalorder %s10, 3
      %p84 = scmp.ne.s32.totalorder %s79, %s81
      %p85 = scmp.eq.s32.totalorder %s10, 0
      %p86 = por %p84, %p85
      %p87 = scmp.ne.s32.totalorder %s79, %s81
      %p88 = scmp.eq.s32.totalorder %s15, 3
      %p89 = por %p87, %p88
      %p90 = scmp.ne.s32.totalorder %s81, %s82
      %p91 = scmp.eq.s32.totalorder %s15, 0
      %p92 = por %p90, %p91
      %p93 = scmp.ne.s32.totalorder %s81, %s82
      %p94 = scmp.eq.s32.totalorder %s16, 3
      %p95 = por %p93, %p94
      %p97 = scmp.ne.s32.totalorder %s82, %s96
      %p98 = scmp.eq.s32.totalorder %s16, 0
      %p99 = por %p97, %p98
      %s101 = sadd.s32 %s100, 1
      %p104 = scmp.eq.s32.totalorder %s10, 3
      %p105 = scmp.ne.s32.totalorder %s100, %s102
      %p106 = scmp.eq.s32.totalorder %s10, 0
      %p107 = por %p105, %p106
      %p108 = scmp.ne.s32.totalorder %s100, %s102
      %p109 = scmp.eq.s32.totalorder %s15, 3
      %p110 = por %p108, %p109
      %p111 = scmp.ne.s32.totalorder %s102, %s103
      %p112 = scmp.eq.s32.totalorder %s15, 0
      %p113 = por %p111, %p112
      %p114 = scmp.ne.s32.totalorder %s102, %s103
      %p115 = scmp.eq.s32.totalorder %s16, 3
      %p116 = por %p114, %p115
      %p118 = scmp.ne.s32.totalorder %s103, %s117
      %p119 = scmp.eq.s32.totalorder %s16, 0
      %p120 = por %p118, %p119
      %s121 = ssub.s32 %s17, %s29
      %s122 = ssub.s32 %s18, %s25
      %s123 = sor.u32 %s121, %s122
      %p124 = scmp.eq.s32.totalorder %s123, 0
      %s126 = sadd.s32 %s125, 1
      %s127 = scalar_select %p124, %s125, %s126
      %p130 = pneg %p124
      %p131 = scmp.eq.s32.totalorder %s10, 3
      %p132 = por %p130, %p131
      %p133 = scmp.ne.s32.totalorder %s125, %s128
      %p134 = scmp.eq.s32.totalorder %s10, 0
      %p135 = por %p133, %p134
      %p136 = scmp.ne.s32.totalorder %s125, %s128
      %p137 = scmp.eq.s32.totalorder %s15, 3
      %p138 = por %p136, %p137
      %p139 = scmp.ne.s32.totalorder %s128, %s129
      %p140 = scmp.eq.s32.totalorder %s15, 0
      %p141 = por %p139, %p140
      %p142 = scmp.ne.s32.totalorder %s128, %s129
      %p143 = scmp.eq.s32.totalorder %s16, 3
      %p144 = por %p142, %p143
      %p146 = scmp.ne.s32.totalorder %s129, %s145
      %p147 = scmp.eq.s32.totalorder %s16, 0
      %p148 = por %p146, %p147
      %p149 = scmp.le.s32.totalorder 1, %s10
      %p150 = scmp.lt.s32.totalorder %s10, 5
      %p151 = pnand %p149, %p150
      %p152 = pneg %p151
      // Predicated region
      $region9: #{tpu_custom_call.1} parent=5 // pred_check
        _
      $region10: #{tpu_custom_call.1} parent=5 // pred_check_branch
        %154 = sbr.rel (%p151) target = $region12
      $region11: #{tpu_custom_call.1} parent=5 // pred_region
        %s155 = ssub.s32 %s10, 1
        // Predicated region
        $region13: #{tpu_custom_call.1} parent=11 // pred_check
          %p156 = pneg %p71
        $region14: #{tpu_custom_call.1} parent=11 // pred_check_branch
          %158 = sbr.rel (%p156) target = $region16
        $region15: #{tpu_custom_call.1} parent=11 // pred_region
          _
        $region16: #{tpu_custom_call.1} parent=11 // pred_fallthru
          _
        // Predicated region
        $region17: #{tpu_custom_call.1} parent=11 // pred_check
          %p159 = pneg %p92
        $region18: #{tpu_custom_call.1} parent=11 // pred_check_branch
          %161 = sbr.rel (%p159) target = $region20
        $region19: #{tpu_custom_call.1} parent=11 // pred_region
          _
        $region20: #{tpu_custom_call.1} parent=11 // pred_fallthru
          _
        // Predicated region
        $region21: #{tpu_custom_call.1} parent=11 // pred_check
          %p162 = pneg %p113
        $region22: #{tpu_custom_call.1} parent=11 // pred_check_branch
          %164 = sbr.rel (%p162) target = $region24
        $region23: #{tpu_custom_call.1} parent=11 // pred_region
          _
        $region24: #{tpu_custom_call.1} parent=11 // pred_fallthru
          _
      $region12: #{tpu_custom_call.1} parent=5 // pred_fallthru
        _
      %p165 = scmp.lt.s32.totalorder %s10, 4
      // Predicated region
      $region25: #{tpu_custom_call.1} parent=5 // pred_check
        %p166 = pneg %p165
      $region26: #{tpu_custom_call.1} parent=5 // pred_check_branch
        %168 = sbr.rel (%p166) target = $region28
      $region27: #{tpu_custom_call.1} parent=5 // pred_region
        // Predicated region
        $region29: #{tpu_custom_call.1} parent=27 // pred_check
          %p169 = pneg %p44
        $region30: #{tpu_custom_call.1} parent=27 // pred_check_branch
          %171 = sbr.rel (%p169) target = $region32
        $region31: #{tpu_custom_call.1} parent=27 // pred_region
          %s172 = sand.u32 %s34, 1
          %s173 = sand.u32 %s34, 1
          %s174 = smul.addr %s173, 64
          %s175 = scalar_lea.vmem [#allocation2], %s174
          %s176 = smul.u32 4, %s18
          %s177 = smul.addr %s17, 32
          %s178 = sadd.s32 %s176, %s177
          %s179 = smul.addr %s178, 4
          %s180 = scalar_lea.vmem %s0, %s179
          // Predicated region
          $region33: #{tpu_custom_call.1} parent=31 // pred_check
            _
          $region34: #{tpu_custom_call.1} parent=31 // pred_check_branch
            %182 = sbr.rel (0) target = $region36
          $region35: #{tpu_custom_call.1} parent=31 // pred_region
            // Predicated region
            $region37: #{tpu_custom_call.1} parent=35 // pred_check
              _
            $region38: #{tpu_custom_call.1} parent=35 // pred_check_branch
              %184 = sbr.rel target = $region40
            $region39: #{tpu_custom_call.1} parent=35 // pred_region
              // Predicated region
              $region52: #{tpu_custom_call.1} parent=39 // pred_check
                _
              $region53: #{tpu_custom_call.1} parent=39 // pred_check_branch
                %230 = sbr.rel (0) target = $region55
              $region54: #{tpu_custom_call.1} parent=39 // pred_region
                loop: start=0, step=1, limit=1
                $region56: #{tpu_custom_call.1} parent=54 // loop_pre_header
                  _
                $region57: #{tpu_custom_call.1} parent=54 // loop_header
                  %s232 = sphi 0, %s236
                  %p233 = scmp.ge.s32.totalorder %s232, 1
                  %s237 = sphi %s180, %s180
                  %s238 = sphi %s175, %s175
                $region58: #{tpu_custom_call.1} parent=54 // loop_header_branch
                  %235 = sbr.rel (%p233) target = $region62
                $region59: #{tpu_custom_call.1} parent=54 // loop_body
                  _
                $region60: #{tpu_custom_call.1} parent=54 // loop_footer
                  %s236 = sadd.s32 1, %s232
                $region61: #{tpu_custom_call.1} parent=54 // loop_footer_branch
                  %231 = sbr.rel target = $region57
                $region62: #{tpu_custom_call.1} parent=54 // loop_exit
                  _
                %s240 = ssub.s32 16, 1
                loop: start=0, step=1, limit=1
                $region63: #{tpu_custom_call.1} parent=54 // loop_pre_header
                  _
                $region64: #{tpu_custom_call.1} parent=54 // loop_header
                  %s242 = sphi 0, %s246
                  %p243 = scmp.ge.s32.totalorder %s242, 1
                  %s247 = sphi %s180, %s180
                  %s248 = sphi %s175, %s175
                $region65: #{tpu_custom_call.1} parent=54 // loop_header_branch
                  %245 = sbr.rel (%p243) target = $region69
                $region66: #{tpu_custom_call.1} parent=54 // loop_body
                  %v249 = vld [vmem:[%s247] sm:%s240]
                  %250 = vst [vmem:[%s248] sm:%s240] %v249
                  %v251 = vld [vmem:[%s247 + $0x4] sm:%s240]
                  %252 = vst [vmem:[%s248 + $0x4] sm:%s240] %v251
                  %v253 = vld [vmem:[%s247 + $0x8] sm:%s240]
                  %254 = vst [vmem:[%s248 + $0x8] sm:%s240] %v253
                  %v255 = vld [vmem:[%s247 + $0xc] sm:%s240]
                  %256 = vst [vmem:[%s248 + $0xc] sm:%s240] %v255
                  %v257 = vld [vmem:[%s247 + $0x20] sm:%s240]
                  %258 = vst [vmem:[%s248 + $0x10] sm:%s240] %v257
                  %v259 = vld [vmem:[%s247 + $0x24] sm:%s240]
                  %260 = vst [vmem:[%s248 + $0x14] sm:%s240] %v259
                  %v261 = vld [vmem:[%s247 + $0x28] sm:%s240]
                  %262 = vst [vmem:[%s248 + $0x18] sm:%s240] %v261
                  %v263 = vld [vmem:[%s247 + $0x2c] sm:%s240]
                  %264 = vst [vmem:[%s248 + $0x1c] sm:%s240] %v263
                  %v265 = vld [vmem:[%s247 + $0x40] sm:%s240]
                  %266 = vst [vmem:[%s248 + $0x20] sm:%s240] %v265
                  %v267 = vld [vmem:[%s247 + $0x44] sm:%s240]
                  %268 = vst [vmem:[%s248 + $0x24] sm:%s240] %v267
                  %v269 = vld [vmem:[%s247 + $0x48] sm:%s240]
                  %270 = vst [vmem:[%s248 + $0x28] sm:%s240] %v269
                  %v271 = vld [vmem:[%s247 + $0x4c] sm:%s240]
                  %272 = vst [vmem:[%s248 + $0x2c] sm:%s240] %v271
                  %v273 = vld [vmem:[%s247 + $0x60] sm:%s240]
                  %274 = vst [vmem:[%s248 + $0x30] sm:%s240] %v273
                  %v275 = vld [vmem:[%s247 + $0x64] sm:%s240]
                  %276 = vst [vmem:[%s248 + $0x34] sm:%s240] %v275
                  %v277 = vld [vmem:[%s247 + $0x68] sm:%s240]
                  %278 = vst [vmem:[%s248 + $0x38] sm:%s240] %v277
                  %v279 = vld [vmem:[%s247 + $0x6c] sm:%s240]
                  %280 = vst [vmem:[%s248 + $0x3c] sm:%s240] %v279
                $region67: #{tpu_custom_call.1} parent=54 // loop_footer
                  %s246 = sadd.s32 1, %s242
                $region68: #{tpu_custom_call.1} parent=54 // loop_footer_branch
                  %241 = sbr.rel target = $region64
                $region69: #{tpu_custom_call.1} parent=54 // loop_exit
                  _
              $region55: #{tpu_custom_call.1} parent=39 // pred_fallthru
                _
            $region40: #{tpu_custom_call.1} parent=35 // pred_fallthru
              _
            // Predicated region
            $region41: #{tpu_custom_call.1} parent=35 // pred_check
              _
            $region42: #{tpu_custom_call.1} parent=35 // pred_check_branch
              %186 = sbr.rel (0) target = $region44
            $region43: #{tpu_custom_call.1} parent=35 // pred_region
              %s188 = ssub.s32 16, 1
              loop: start=0, step=1, limit=1
              $region45: #{tpu_custom_call.1} parent=43 // loop_pre_header
                _
              $region46: #{tpu_custom_call.1} parent=43 // loop_header
                %s190 = sphi 0, %s194
                %p191 = scmp.ge.s32.totalorder %s190, 1
                %s195 = sphi %s180, %s180
                %s196 = sphi %s175, %s175
              $region47: #{tpu_custom_call.1} parent=43 // loop_header_branch
                %193 = sbr.rel (%p191) target = $region51
              $region48: #{tpu_custom_call.1} parent=43 // loop_body
                %v197 = vld [vmem:[%s195] sm:%s188]
                %198 = vst [vmem:[%s196] sm:%s188] %v197
                %v199 = vld [vmem:[%s195 + $0x4] sm:%s188]
                %200 = vst [vmem:[%s196 + $0x4] sm:%s188] %v199
                %v201 = vld [vmem:[%s195 + $0x8] sm:%s188]
                %202 = vst [vmem:[%s196 + $0x8] sm:%s188] %v201
                %v203 = vld [vmem:[%s195 + $0xc] sm:%s188]
                %204 = vst [vmem:[%s196 + $0xc] sm:%s188] %v203
                %v205 = vld [vmem:[%s195 + $0x20] sm:%s188]
                %206 = vst [vmem:[%s196 + $0x10] sm:%s188] %v205
                %v207 = vld [vmem:[%s195 + $0x24] sm:%s188]
                %208 = vst [vmem:[%s196 + $0x14] sm:%s188] %v207
                %v209 = vld [vmem:[%s195 + $0x28] sm:%s188]
                %210 = vst [vmem:[%s196 + $0x18] sm:%s188] %v209
                %v211 = vld [vmem:[%s195 + $0x2c] sm:%s188]
                %212 = vst [vmem:[%s196 + $0x1c] sm:%s188] %v211
                %v213 = vld [vmem:[%s195 + $0x40] sm:%s188]
                %214 = vst [vmem:[%s196 + $0x20] sm:%s188] %v213
                %v215 = vld [vmem:[%s195 + $0x44] sm:%s188]
                %216 = vst [vmem:[%s196 + $0x24] sm:%s188] %v215
                %v217 = vld [vmem:[%s195 + $0x48] sm:%s188]
                %218 = vst [vmem:[%s196 + $0x28] sm:%s188] %v217
                %v219 = vld [vmem:[%s195 + $0x4c] sm:%s188]
                %220 = vst [vmem:[%s196 + $0x2c] sm:%s188] %v219
                %v221 = vld [vmem:[%s195 + $0x60] sm:%s188]
                %222 = vst [vmem:[%s196 + $0x30] sm:%s188] %v221
                %v223 = vld [vmem:[%s195 + $0x64] sm:%s188]
                %224 = vst [vmem:[%s196 + $0x34] sm:%s188] %v223
                %v225 = vld [vmem:[%s195 + $0x68] sm:%s188]
                %226 = vst [vmem:[%s196 + $0x38] sm:%s188] %v225
                %v227 = vld [vmem:[%s195 + $0x6c] sm:%s188]
                %228 = vst [vmem:[%s196 + $0x3c] sm:%s188] %v227
              $region49: #{tpu_custom_call.1} parent=43 // loop_footer
                %s194 = sadd.s32 1, %s190
              $region50: #{tpu_custom_call.1} parent=43 // loop_footer_branch
                %189 = sbr.rel target = $region46
              $region51: #{tpu_custom_call.1} parent=43 // loop_exit
                _
            $region44: #{tpu_custom_call.1} parent=35 // pred_fallthru
              _
          $region36: #{tpu_custom_call.1} parent=31 // pred_fallthru
            _
          %281 = vnop
        $region32: #{tpu_custom_call.1} parent=27 // pred_fallthru
          _
      $region28: #{tpu_custom_call.1} parent=5 // pred_fallthru
        _
      %p282 = scmp.le.s32.totalorder 1, %s10
      %p283 = scmp.lt.s32.totalorder %s10, 5
      %p284 = pnand %p282, %p283
      %p285 = pneg %p284
      // Predicated region
      $region70: #{tpu_custom_call.1} parent=5 // pred_check
        _
      $region71: #{tpu_custom_call.1} parent=5 // pred_check_branch
        %287 = sbr.rel (%p284) target = $region73
      $region72: #{tpu_custom_call.1} parent=5 // pred_region
        %s288 = ssub.s32 %s10, 1
        %s289 = sand.u32 %s37, 1
        %s290 = sand.u32 %s37, 1
        %s291 = smul.addr %s290, 64
        %s292 = scalar_lea.vmem [#allocation2], %s291
        // Predicated region
        $region74: #{tpu_custom_call.1} parent=72 // pred_check
          %p293 = pneg %p50
        $region75: #{tpu_custom_call.1} parent=72 // pred_check_branch
          %295 = sbr.rel (%p293) target = $region77
        $region76: #{tpu_custom_call.1} parent=72 // pred_region
          _
        $region77: #{tpu_custom_call.1} parent=72 // pred_fallthru
          _
        %s296 = sand.u32 %s37, 1
        %s297 = sand.u32 %s37, 1
        %s298 = smul.addr %s297, 64
        %s299 = scalar_lea.vmem [#allocation2], %s298
        %p300 = pneg %p50
        %p301 = pneg %p47
        %p302 = pneg %p71
        %p303 = pneg %p68
        %p304 = pneg %p92
        %p305 = pneg %p89
        %p306 = pneg %p113
        %p307 = pneg %p110
        %p308 = pneg %p141
        %p309 = pneg %p138
        %s310 = smul.u32 4, %s20
        %p311 = scmp.lt.s32.totalorder %s19, 1
        %s312 = scalar_select %p311, %s19, 1
        %p313 = scmp.lt.s32.totalorder %s310, 7
        %s314 = scalar_select %p313, %s310, 7
        %s315 = smul.addr %s312, 8
        %s316 = sadd.s32 %s314, %s315
        %s317 = smul.addr %s316, 8
        %s318 = scalar_lea.vmem %s4, %s317
        %s319 = smul.u32 4, %s20
        %s320 = smul.u32 4, %s20
        %p321 = scmp.lt.s32.totalorder %s19, 1
        %s322 = scalar_select %p321, %s19, 1
        %p323 = scmp.lt.s32.totalorder %s320, 7
        %s324 = scalar_select %p323, %s320, 7
        %s325 = smul.addr %s322, 8
        %s326 = sadd.s32 %s324, %s325
        %s327 = smul.addr %s326, 8
        %s328 = scalar_lea.vmem %s4, %s327
        %s329 = smul.u32 4, %s20
        %v331 = vld [vmem:[%s1] sm:$0x1]
        %v332 = vld [vmem:[%s2] sm:$0x1]
        %v333 = vld [vmem:[%s292] sm:$0xf]
        %v334 = vld [vmem:[%s292 + $0x4] sm:$0xf]
        %v335 = vld [vmem:[%s292 + $0x8] sm:$0xf]
        %v336 = vld [vmem:[%s292 + $0xc] sm:$0xf]
        %v337 = vunpack.c.l.bf16 %v333
        %v338 = vunpack.c.l.bf16 %v334
        %v339 = vunpack.c.l.bf16 %v335
        %v340 = vunpack.c.l.bf16 %v336
        %v342 = vperm.slane %v331, 0
        %v344 = vmul.f32 %v337, %v342
        %v345 = vmul.f32 %v338, %v342
        %v346 = vmul.f32 %v339, %v342
        %v347 = vmul.f32 %v340, %v342
        %v349 = vperm.slane %v332, 0
        %v351 = vadd.f32 %v344, %v349
        %v352 = vadd.f32 %v345, %v349
        %v353 = vadd.f32 %v346, %v349
        %v354 = vadd.f32 %v347, %v349
        %v355 = vmax.f32 %v351, 0.0
        %v356 = vmax.f32 %v352, 0.0
        %v357 = vmax.f32 %v353, 0.0
        %v358 = vmax.f32 %v354, 0.0
        %s359 = scalar_lea.vmem %s292, 16 [#allocation2]
        %v360 = vld [vmem:[%s359] sm:$0xf]
        %v361 = vld [vmem:[%s359 + $0x4] sm:$0xf]
        %v362 = vld [vmem:[%s359 + $0x8] sm:$0xf]
        %v363 = vld [vmem:[%s359 + $0xc] sm:$0xf]
        %v364 = vunpack.c.l.bf16 %v360
        %v365 = vunpack.c.l.bf16 %v361
        %v366 = vunpack.c.l.bf16 %v362
        %v367 = vunpack.c.l.bf16 %v363
        %v368 = vmul.f32 %v364, %v342
        %v369 = vmul.f32 %v365, %v342
        %v370 = vmul.f32 %v366, %v342
        %v371 = vmul.f32 %v367, %v342
        %v372 = vadd.f32 %v368, %v349
        %v373 = vadd.f32 %v369, %v349
        %v374 = vadd.f32 %v370, %v349
        %v375 = vadd.f32 %v371, %v349
        %v376 = vmax.f32 %v372, 0.0
        %v377 = vmax.f32 %v373, 0.0
        %v378 = vmax.f32 %v374, 0.0
        %v379 = vmax.f32 %v375, 0.0
        %v380 = vadd.f32 %v355, %v376
        %v381 = vadd.f32 %v356, %v377
        %v382 = vadd.f32 %v357, %v378
        %v383 = vadd.f32 %v358, %v379
        %s384 = scalar_lea.vmem %s292, 32 [#allocation2]
        %v385 = vld [vmem:[%s384] sm:$0xf]
        %v386 = vld [vmem:[%s384 + $0x4] sm:$0xf]
        %v387 = vld [vmem:[%s384 + $0x8] sm:$0xf]
        %v388 = vld [vmem:[%s384 + $0xc] sm:$0xf]
        %v389 = vunpack.c.l.bf16 %v385
        %v390 = vunpack.c.l.bf16 %v386
        %v391 = vunpack.c.l.bf16 %v387
        %v392 = vunpack.c.l.bf16 %v388
        %v393 = vmul.f32 %v389, %v342
        %v394 = vmul.f32 %v390, %v342
        %v395 = vmul.f32 %v391, %v342
        %v396 = vmul.f32 %v392, %v342
        %v397 = vadd.f32 %v393, %v349
        %v398 = vadd.f32 %v394, %v349
        %v399 = vadd.f32 %v395, %v349
        %v400 = vadd.f32 %v396, %v349
        %v401 = vmax.f32 %v397, 0.0
        %v402 = vmax.f32 %v398, 0.0
        %v403 = vmax.f32 %v399, 0.0
        %v404 = vmax.f32 %v400, 0.0
        %v405 = vadd.f32 %v380, %v401
        %v406 = vadd.f32 %v381, %v402
        %v407 = vadd.f32 %v382, %v403
        %v408 = vadd.f32 %v383, %v404
        %s409 = scalar_lea.vmem %s292, 48 [#allocation2]
        %v410 = vld [vmem:[%s409] sm:$0xf]
        %v411 = vld [vmem:[%s409 + $0x4] sm:$0xf]
        %v412 = vld [vmem:[%s409 + $0x8] sm:$0xf]
        %v413 = vld [vmem:[%s409 + $0xc] sm:$0xf]
        %v414 = vunpack.c.l.bf16 %v410
        %v415 = vunpack.c.l.bf16 %v411
        %v416 = vunpack.c.l.bf16 %v412
        %v417 = vunpack.c.l.bf16 %v413
        %v418 = vmul.f32 %v414, %v342
        %v419 = vmul.f32 %v415, %v342
        %v420 = vmul.f32 %v416, %v342
        %v421 = vmul.f32 %v417, %v342
        %v422 = vadd.f32 %v418, %v349
        %v423 = vadd.f32 %v419, %v349
        %v424 = vadd.f32 %v420, %v349
        %v425 = vadd.f32 %v421, %v349
        %v426 = vmax.f32 %v422, 0.0
        %v427 = vmax.f32 %v423, 0.0
        %v428 = vmax.f32 %v424, 0.0
        %v429 = vmax.f32 %v425, 0.0
        %v430 = vadd.f32 %v405, %v426
        %v431 = vadd.f32 %v406, %v427
        %v432 = vadd.f32 %v407, %v428
        %v433 = vadd.f32 %v408, %v429
        %v434 = vpack.c.bf16 %v431, %v430
        %v435 = vpack.c.bf16 %v433, %v432
        %v436 = vld [vmem:[%s3] sm:$0x3]
        %vm437 = vcmask 31744
        %v439 = vsel %vm437, %v434, 0
        %v442 = vsel %vm437, %v435, 0
        %vm444 = vcmask 1041408
        %v446 = vsel %vm444, %v436, 0
        %448 = vmatpush.bf16.msra.mxu0 0
        %449 = vmatpush.bf16.msra.mxu0 0
        %450 = vmatpush.bf16.msra.mxu0 0
        %451 = vmatpush.bf16.msra.mxu0 0
        %452 = vmatpush.bf16.msra.mxu0 0
        %453 = vmatpush.bf16.msra.mxu0 0
        %454 = vmatpush.bf16.msra.mxu0 0
        %455 = vmatpush.bf16.msra.mxu0 %v446
        %456 = vmatmul.bf16.gmra.mxu0 %v439
        %v457 = vpop.f32.mrf.mxu0
        %v458 = vadd.f32 0.0, %v457
        %v459 = vpop.f32.mrf.mxu0
        %v460 = vadd.f32 0.0, %v459
        %461 = vmatmul.bf16.gmra.mxu0 %v442
        %v462 = vpop.f32.mrf.mxu0
        %v463 = vadd.f32 0.0, %v462
        %v464 = vpop.f32.mrf.mxu0
        %v465 = vadd.f32 0.0, %v464
        %466 = vdwg.mxu0
        %vm467 = vcmask 64512
        %468 = vst.msk [vmem:[%s328] sm:$0xff] %vm467, %v458
        %469 = vst.msk [vmem:[%s328 + $0x8] sm:$0xff] %vm467, %v460
        %470 = vst.msk [vmem:[%s328 + $0x10] sm:$0xff] %vm467, %v463
        %471 = vst.msk [vmem:[%s328 + $0x18] sm:$0xff] %vm467, %v465
        %s472 = smul.u32 4, %s20
        %p473 = scmp.lt.s32.totalorder %s19, 1
        %s474 = scalar_select %p473, %s19, 1
        %p475 = scmp.lt.s32.totalorder %s472, 7
        %s476 = scalar_select %p475, %s472, 7
        %s477 = smul.addr %s474, 8
        %s478 = sadd.s32 %s476, %s477
        %s479 = smul.addr %s478, 8
        %s480 = scalar_lea.vmem %s4, %s479
        // Predicated region
        $region78: #{tpu_custom_call.1} parent=72 // pred_check
          %p481 = pneg %p138
        $region79: #{tpu_custom_call.1} parent=72 // pred_check_branch
          %483 = sbr.rel (%p481) target = $region81
        $region80: #{tpu_custom_call.1} parent=72 // pred_region
          %s484 = smul.u32 4, %s20
        $region81: #{tpu_custom_call.1} parent=72 // pred_fallthru
          _
      $region73: #{tpu_custom_call.1} parent=5 // pred_fallthru
        _
      %p485 = scmp.le.s32.totalorder 2, %s10
      // Predicated region
      $region82: #{tpu_custom_call.1} parent=5 // pred_check
        %p486 = pneg %p485
      $region83: #{tpu_custom_call.1} parent=5 // pred_check_branch
        %488 = sbr.rel (%p486) target = $region85
      $region84: #{tpu_custom_call.1} parent=5 // pred_region
        %s489 = ssub.s32 %s10, 2
        // Predicated region
        $region86: #{tpu_custom_call.1} parent=84 // pred_check
          %p490 = pneg %p144
        $region87: #{tpu_custom_call.1} parent=84 // pred_check_branch
          %492 = sbr.rel (%p490) target = $region89
        $region88: #{tpu_custom_call.1} parent=84 // pred_region
          %s493 = smul.u32 4, %s22
          %p494 = scmp.lt.s32.totalorder %s21, 1
          %s495 = scalar_select %p494, %s21, 1
          %p496 = scmp.lt.s32.totalorder %s493, 7
          %s497 = scalar_select %p496, %s493, 7
          %s498 = smul.addr %s495, 8
          %s499 = sadd.s32 %s497, %s498
          %s500 = smul.addr %s499, 8
          %s501 = scalar_lea.vmem %s4, %s500
        $region89: #{tpu_custom_call.1} parent=84 // pred_fallthru
          _
      $region85: #{tpu_custom_call.1} parent=5 // pred_fallthru
        _
    $region6: #{tpu_custom_call.1} parent=1 // loop_footer
      %s14 = sadd.s32 1, %s10
    $region7: #{tpu_custom_call.1} parent=1 // loop_footer_branch
      %9 = sbr.rel target = $region3
    $region8: #{tpu_custom_call.1} parent=1 // loop_exit
      _

</llo_original>
